<compile_context>
chip_gen: v5e
topology: v5e:2x2
jax: 0.10.0
libtpu: 0.0.40
codegen_flags: <defaults>
</compile_context>

<pallas_src>
import math

import jax
import jax.numpy as jnp
from jax.experimental import pallas as pl
from jax.experimental.pallas import tpu as pltpu

# ---- model hyper-parameters (small, consistent with the module) ----
B = 2          # batch
T = 8          # seq_len
D = 32         # latent_dim
H = 4          # num_head
E = 64         # time_embed_dim
EPS = 1e-5


def _tsa_kernel(x_ref, emb_ref, amask_ref, hmask_ref,
                g1_ref, b1_ref,
                wqkv_ref, bqkv_ref,
                we_ref, be_ref,
                g2_ref, b2_ref, wo_ref, bo_ref,
                o_ref):
    x = x_ref[...]                       # (B*T, D)  batch folded into sublanes
    bt, d = x.shape
    hm = hmask_ref[...]                  # (H, 1, D) 0/1 per-head lane masks
    nh = hm.shape[0]

    # --- LayerNorm(x) ---
    mu = jnp.mean(x, axis=-1, keepdims=True)
    var = jnp.mean(jnp.square(x - mu), axis=-1, keepdims=True)
    xn = (x - mu) * jax.lax.rsqrt(var + EPS) * g1_ref[...] + b1_ref[...]

    # --- fused QKV projection: one (B*T, D) @ (D, 3D) matmul ---
    qkv = jnp.dot(xn, wqkv_ref[...], preferred_element_type=jnp.float32) + bqkv_ref[...]
    q = qkv[:, :d]            # already pre-scaled by 1/sqrt(Dh) (folded into Wq, bq)
    k = qkv[:, d:2 * d]
    v = qkv[:, 2 * d:]

    # --- head-batched attention (leading batch dim = head, no transposes / concat) ---
    # Masking q (and v) per head makes the full-D contraction equal to the per-head Dh
    # contraction, so we never lane-slice into (T, Dh) sub-tiles.
    q_h = q[None, :, :] * hm                                   # (H, B*T, D)
    k_h = jnp.broadcast_to(k[None, :, :], (nh, bt, d))         # (H, B*T, D)
    v_h = v[None, :, :] * hm                                   # (H, B*T, D)

    s = jnp.einsum('hqd,hkd->hqk', q_h, k_h,
                   preferred_element_type=jnp.float32)         # (H, B*T, B*T)
    s = s + amask_ref[...][None, :, :]                         # block-diag + src_mask, additive
    s = s - jnp.max(s, axis=-1, keepdims=True)
    p = jnp.exp(s)
    p = p * pl.reciprocal(jnp.sum(p, axis=-1, keepdims=True), approx=True)  # EUP, not VALU div
    y = jnp.einsum('hqk,hkd->hqd', p, v_h,
                   preferred_element_type=jnp.float32)         # (H, B*T, D)
    y = jnp.sum(y, axis=0)                                     # (B*T, D) heads re-merged by mask

    # --- StylizationBlock ---
    e = emb_ref[...]                                           # (B*T, E), rows repeated per token
    e = e * jax.nn.sigmoid(e)                                  # SiLU
    eo = jnp.dot(e, we_ref[...], preferred_element_type=jnp.float32) + be_ref[...]  # (B*T, 2D)
    sc = eo[:, :d]                                             # scale
    sh = eo[:, d:]                                             # shift

    mu2 = jnp.mean(y, axis=-1, keepdims=True)
    var2 = jnp.mean(jnp.square(y - mu2), axis=-1, keepdims=True)
    yn = (y - mu2) * jax.lax.rsqrt(var2 + EPS) * g2_ref[...] + b2_ref[...]
    hh = yn * (1.0 + sc) + sh
    hh = hh * jax.nn.sigmoid(hh)                               # SiLU; dropout = identity
    hh = jnp.dot(hh, wo_ref[...], preferred_element_type=jnp.float32) + bo_ref[...]

    o_ref[...] = x + hh


def temporal_self_attention(x, emb, src_mask, p):
    b, t, d = x.shape
    nh = H
    dh = d // nh
    scale = 1.0 / math.sqrt(dh)

    # ---- host-side packing / layout plumbing (no kernel compute moved out) ----
    # Fold score scale into Wq/bq; pack QKV weights into one (D, 3D) matrix.
    w_qkv = jnp.concatenate([p["wq"] * scale, p["wk"], p["wv"]], axis=1)   # (D, 3D)
    b_qkv = jnp.concatenate([p["bq"] * scale, p["bk"], p["bv"]], axis=1)   # (1, 3D)

    x_flat = x.reshape(b * t, d)                                           # (B*T, D)
    emb_rep = jnp.repeat(emb, t, axis=0)                                   # (B*T, E)

    # Block-diagonal additive attention mask over the folded (B*T) key axis.
    blk = jnp.eye(b, dtype=x.dtype)[:, None, :, None] * src_mask[:, :, None, :]
    add_mask = ((1.0 - blk.reshape(b * t, b * t)) * (-100000.0)).astype(jnp.float32)

    # Per-head 0/1 lane masks, shape (H, 1, D).
    head_id = jnp.arange(d, dtype=jnp.int32) // dh
    head_mask = (head_id[None, :] ==
                 jnp.arange(nh, dtype=jnp.int32)[:, None]).astype(jnp.float32)[:, None, :]

    # Single invocation (grid collapsed); every operand lives wholesale in VMEM (<100 KiB).
    vmem = pl.BlockSpec(memory_space=pltpu.MemorySpace.VMEM)
    out_flat = pl.pallas_call(
        _tsa_kernel,
        out_shape=jax.ShapeDtypeStruct((b * t, d), jnp.float32),
        in_specs=[vmem] * 14,
        out_specs=vmem,
    )(x_flat, emb_rep, add_mask, head_mask,
      p["g1"], p["b1"], w_qkv, b_qkv,
      p["we"], p["be"], p["g2"], p["b2"], p["wo"], p["bo"])
    return out_flat.reshape(b, t, d)


# ---------------- pure-JAX reference (mirrors the PyTorch forward) ----------------
def ref_forward(x, emb, src_mask, p):
    def ln(z, g, b):
        mu = z.mean(-1, keepdims=True)
        var = ((z - mu) ** 2).mean(-1, keepdims=True)
        return (z - mu) / jnp.sqrt(var + EPS) * g + b

    b, t, d = x.shape
    dh = d // H
    xn = ln(x, p["g1"], p["b1"])
    q = (xn @ p["wq"] + p["bq"]).reshape(b, t, H, dh)
    k = (xn @ p["wk"] + p["bk"]).reshape(b, t, H, dh)
    v = (xn @ p["wv"] + p["bv"]).reshape(b, t, H, dh)
    att = jnp.einsum("bnhd,bmhd->bnmh", q, k) / math.sqrt(dh)
    att = att + (1.0 - src_mask[..., None]) * (-100000.0)
    w = jax.nn.softmax(att, axis=2)
    y = jnp.einsum("bnmh,bmhd->bnhd", w, v).reshape(b, t, d)

    es = emb * jax.nn.sigmoid(emb)
    eo = es @ p["we"] + p["be"]
    sc, sh = eo[:, None, :d], eo[:, None, d:]
    hn = ln(y, p["g2"], p["b2"]) * (1.0 + sc) + sh
    hn = hn * jax.nn.sigmoid(hn)
    hn = hn @ p["wo"] + p["bo"]
    return x + hn


def make_params(key):
    ks = jax.random.split(key, 8)
    s = 0.05
    p = {
        "g1": jnp.ones((1, D), jnp.float32),
        "b1": jnp.zeros((1, D), jnp.float32),
        "wq": s * jax.random.normal(ks[0], (D, D), jnp.float32),
        "bq": s * jax.random.normal(ks[1], (1, D), jnp.float32),
        "wk": s * jax.random.normal(ks[2], (D, D), jnp.float32),
        "bk": s * jax.random.normal(ks[3], (1, D), jnp.float32),
        "wv": s * jax.random.normal(ks[4], (D, D), jnp.float32),
        "bv": s * jax.random.normal(ks[5], (1, D), jnp.float32),
        "we": s * jax.random.normal(ks[6], (E, 2 * D), jnp.float32),
        "be": jnp.zeros((1, 2 * D), jnp.float32),
        "g2": jnp.ones((1, D), jnp.float32),
        "b2": jnp.zeros((1, D), jnp.float32),
        # NOTE: the PyTorch module zero-inits this Linear (zero_module); we use small
        # nonzero values so the full kernel path is actually exercised/validated.
        "wo": s * jax.random.normal(ks[7], (D, D), jnp.float32),
        "bo": jnp.zeros((1, D), jnp.float32),
    }
    return p


if __name__ == "__main__":
    key = jax.random.PRNGKey(0)
    kx, ke, kp = jax.random.split(key, 3)

    x = jax.random.normal(kx, (B, T, D), jnp.float32)
    emb = jax.random.normal(ke, (B, E), jnp.float32)
    # lower-triangular (causal-ish) binary src_mask, shape (B, T, T)
    src_mask = jnp.tril(jnp.ones((T, T), jnp.float32))[None].repeat(B, axis=0)

    params = make_params(kp)

    out = jax.jit(temporal_self_attention)(x, emb, src_mask, params)
    out = jax.block_until_ready(out)

    ref = ref_forward(x, emb, src_mask, params)
    assert out.shape == (B, T, D)
    # Tolerance 1e-3: pl.reciprocal(approx=True) in the softmax denominator introduces a
    # small (<<1e-3) relative error relative to the exact-divide reference.
    err = jnp.max(jnp.abs(out - ref))
    assert jnp.allclose(out, ref, rtol=1e-3, atol=1e-3), f"max abs err {err}"

    print("KERNEL_OK")
</pallas_src>

<mosaic_0001>
module attributes {stable_mosaic.version = 11 : i64} {
  func.func @_tsa_kernel(%arg0: memref<16x32xf32, #tpu.memory_space<vmem>>, %arg1: memref<16x64xf32, #tpu.memory_space<vmem>>, %arg2: memref<16x16xf32, #tpu.memory_space<vmem>>, %arg3: memref<4x1x32xf32, #tpu.memory_space<vmem>>, %arg4: memref<1x32xf32, #tpu.memory_space<vmem>>, %arg5: memref<1x32xf32, #tpu.memory_space<vmem>>, %arg6: memref<32x96xf32, #tpu.memory_space<vmem>>, %arg7: memref<1x96xf32, #tpu.memory_space<vmem>>, %arg8: memref<64x64xf32, #tpu.memory_space<vmem>>, %arg9: memref<1x64xf32, #tpu.memory_space<vmem>>, %arg10: memref<1x32xf32, #tpu.memory_space<vmem>>, %arg11: memref<1x32xf32, #tpu.memory_space<vmem>>, %arg12: memref<32x32xf32, #tpu.memory_space<vmem>>, %arg13: memref<1x32xf32, #tpu.memory_space<vmem>>, %arg14: memref<16x32xf32, #tpu.memory_space<vmem>>) attributes {dimension_semantics = [], scalar_prefetch = 0 : i64, scratch_operands = 0 : i64, tpu.core_type = #tpu.core_type<tc>} {
    %c0 = arith.constant 0 : index
    %c0_0 = arith.constant 0 : index
    %0 = vector.load %arg0[%c0, %c0_0] : memref<16x32xf32, #tpu.memory_space<vmem>>, vector<16x32xf32>
    %c0_1 = arith.constant 0 : index
    %c0_2 = arith.constant 0 : index
    %c0_3 = arith.constant 0 : index
    %1 = vector.load %arg3[%c0_1, %c0_2, %c0_3] : memref<4x1x32xf32, #tpu.memory_space<vmem>>, vector<4x1x32xf32>
    %cst = arith.constant dense<0.000000e+00> : vector<16xf32>
    %2 = vector.multi_reduction <add>, %0, %cst [1] : vector<16x32xf32> to vector<16xf32>
    %3 = vector.shape_cast %2 : vector<16xf32> to vector<16x1xf32>
    %cst_4 = arith.constant 3.200000e+01 : f32
    %4 = vector.broadcast %cst_4 : f32 to vector<16x1xf32>
    %5 = arith.divf %3, %4 : vector<16x1xf32>
    %6 = vector.broadcast %5 : vector<16x1xf32> to vector<16x32xf32>
    %7 = arith.subf %0, %6 : vector<16x32xf32>
    %8 = arith.mulf %7, %7 : vector<16x32xf32>
    %cst_5 = arith.constant dense<0.000000e+00> : vector<16xf32>
    %9 = vector.multi_reduction <add>, %8, %cst_5 [1] : vector<16x32xf32> to vector<16xf32>
    %10 = vector.shape_cast %9 : vector<16xf32> to vector<16x1xf32>
    %cst_6 = arith.constant 3.200000e+01 : f32
    %11 = vector.broadcast %cst_6 : f32 to vector<16x1xf32>
    %12 = arith.divf %10, %11 : vector<16x1xf32>
    %13 = vector.broadcast %5 : vector<16x1xf32> to vector<16x32xf32>
    %14 = arith.subf %0, %13 : vector<16x32xf32>
    %cst_7 = arith.constant 9.99999974E-6 : f32
    %15 = vector.broadcast %cst_7 : f32 to vector<16x1xf32>
    %16 = arith.addf %12, %15 : vector<16x1xf32>
    %17 = math.rsqrt %16 : vector<16x1xf32>
    %18 = vector.broadcast %17 : vector<16x1xf32> to vector<16x32xf32>
    %19 = arith.mulf %14, %18 : vector<16x32xf32>
    %c0_8 = arith.constant 0 : index
    %c0_9 = arith.constant 0 : index
    %20 = vector.load %arg4[%c0_8, %c0_9] : memref<1x32xf32, #tpu.memory_space<vmem>>, vector<1x32xf32>
    %21 = vector.broadcast %20 : vector<1x32xf32> to vector<16x32xf32>
    %22 = arith.mulf %19, %21 : vector<16x32xf32>
    %c0_10 = arith.constant 0 : index
    %c0_11 = arith.constant 0 : index
    %23 = vector.load %arg5[%c0_10, %c0_11] : memref<1x32xf32, #tpu.memory_space<vmem>>, vector<1x32xf32>
    %24 = vector.broadcast %23 : vector<1x32xf32> to vector<16x32xf32>
    %25 = arith.addf %22, %24 : vector<16x32xf32>
    %c0_12 = arith.constant 0 : index
    %c0_13 = arith.constant 0 : index
    %26 = vector.load %arg6[%c0_12, %c0_13] : memref<32x96xf32, #tpu.memory_space<vmem>>, vector<32x96xf32>
    %cst_14 = arith.constant dense<0.000000e+00> : vector<16x96xf32>
    %27 = tpu.matmul %25, %26, %cst_14 {dimension_numbers = #tpu.dot_dimension_numbers<[1], [0], [0], [1], [0, 0, 1, 1], [], []>} : vector<16x32xf32>, vector<32x96xf32>, vector<16x96xf32> -> vector<16x96xf32>
    %c0_15 = arith.constant 0 : index
    %c0_16 = arith.constant 0 : index
    %28 = vector.load %arg7[%c0_15, %c0_16] : memref<1x96xf32, #tpu.memory_space<vmem>>, vector<1x96xf32>
    %29 = vector.broadcast %28 : vector<1x96xf32> to vector<16x96xf32>
    %30 = arith.addf %27, %29 : vector<16x96xf32>
    %31 = vector.extract_strided_slice %30 {offsets = [0, 0], sizes = [16, 32], strides = [1, 1]} : vector<16x96xf32> to vector<16x32xf32>
    %32 = vector.extract_strided_slice %30 {offsets = [0, 32], sizes = [16, 32], strides = [1, 1]} : vector<16x96xf32> to vector<16x32xf32>
    %33 = vector.extract_strided_slice %30 {offsets = [0, 64], sizes = [16, 32], strides = [1, 1]} : vector<16x96xf32> to vector<16x32xf32>
    %34 = vector.shape_cast %31 : vector<16x32xf32> to vector<1x16x32xf32>
    %35 = vector.broadcast %34 : vector<1x16x32xf32> to vector<4x16x32xf32>
    %36 = vector.broadcast %1 : vector<4x1x32xf32> to vector<4x16x32xf32>
    %37 = arith.mulf %35, %36 : vector<4x16x32xf32>
    %38 = vector.shape_cast %32 : vector<16x32xf32> to vector<1x16x32xf32>
    %39 = vector.shape_cast %38 : vector<1x16x32xf32> to vector<1x16x32xf32>
    %40 = vector.broadcast %39 : vector<1x16x32xf32> to vector<4x16x32xf32>
    %41 = vector.shape_cast %33 : vector<16x32xf32> to vector<1x16x32xf32>
    %42 = vector.broadcast %41 : vector<1x16x32xf32> to vector<4x16x32xf32>
    %43 = vector.broadcast %1 : vector<4x1x32xf32> to vector<4x16x32xf32>
    %44 = arith.mulf %42, %43 : vector<4x16x32xf32>
    "tpu.trace_start"() <{level = 10 : i32, message = "hqd,hkd->hqk"}> : () -> ()
    %cst_17 = arith.constant dense<0.000000e+00> : vector<4x16x16xf32>
    %45 = tpu.matmul %37, %40, %cst_17 {dimension_numbers = #tpu.dot_dimension_numbers<[2], [2], [1], [1], [0, 0, 0, 1, 1, 1], [0], [0]>} : vector<4x16x32xf32>, vector<4x16x32xf32>, vector<4x16x16xf32> -> vector<4x16x16xf32>
    "tpu.trace_stop"() : () -> ()
    %c0_18 = arith.constant 0 : index
    %c0_19 = arith.constant 0 : index
    %46 = vector.load %arg2[%c0_18, %c0_19] : memref<16x16xf32, #tpu.memory_space<vmem>>, vector<16x16xf32>
    %47 = vector.shape_cast %46 : vector<16x16xf32> to vector<1x16x16xf32>
    %48 = vector.broadcast %47 : vector<1x16x16xf32> to vector<4x16x16xf32>
    %49 = arith.addf %45, %48 : vector<4x16x16xf32>
    %cst_20 = arith.constant dense<0xFF800000> : vector<4x16xf32>
    %50 = vector.multi_reduction <maximumf>, %49, %cst_20 [2] : vector<4x16x16xf32> to vector<4x16xf32>
    %51 = vector.shape_cast %50 : vector<4x16xf32> to vector<4x16x1xf32>
    %52 = vector.broadcast %51 : vector<4x16x1xf32> to vector<4x16x16xf32>
    %53 = arith.subf %49, %52 : vector<4x16x16xf32>
    %54 = math.exp %53 : vector<4x16x16xf32>
    %cst_21 = arith.constant dense<0.000000e+00> : vector<4x16xf32>
    %55 = vector.multi_reduction <add>, %54, %cst_21 [2] : vector<4x16x16xf32> to vector<4x16xf32>
    %56 = vector.shape_cast %55 : vector<4x16xf32> to vector<4x16x1xf32>
    %57 = tpu.reciprocal %56 {approx = true} : vector<4x16x1xf32> -> vector<4x16x1xf32>
    %58 = vector.broadcast %57 : vector<4x16x1xf32> to vector<4x16x16xf32>
    %59 = arith.mulf %54, %58 : vector<4x16x16xf32>
    "tpu.trace_start"() <{level = 10 : i32, message = "hqk,hkd->hqd"}> : () -> ()
    %cst_22 = arith.constant dense<0.000000e+00> : vector<4x16x32xf32>
    %60 = tpu.matmul %59, %44, %cst_22 {dimension_numbers = #tpu.dot_dimension_numbers<[2], [1], [1], [2], [0, 0, 0, 1, 1, 2], [0], [0]>} : vector<4x16x16xf32>, vector<4x16x32xf32>, vector<4x16x32xf32> -> vector<4x16x32xf32>
    "tpu.trace_stop"() : () -> ()
    %cst_23 = arith.constant dense<0.000000e+00> : vector<16x32xf32>
    %61 = vector.multi_reduction <add>, %60, %cst_23 [0] : vector<4x16x32xf32> to vector<16x32xf32>
    %c0_24 = arith.constant 0 : index
    %c0_25 = arith.constant 0 : index
    %62 = vector.load %arg1[%c0_24, %c0_25] : memref<16x64xf32, #tpu.memory_space<vmem>>, vector<16x64xf32>
    %63 = arith.negf %62 : vector<16x64xf32>
    %64 = math.exp %63 : vector<16x64xf32>
    %cst_26 = arith.constant 1.000000e+00 : f32
    %65 = vector.broadcast %cst_26 : f32 to vector<16x64xf32>
    %66 = arith.addf %65, %64 : vector<16x64xf32>
    %67 = arith.divf %65, %66 : vector<16x64xf32>
    %68 = arith.mulf %62, %67 : vector<16x64xf32>
    %c0_27 = arith.constant 0 : index
    %c0_28 = arith.constant 0 : index
    %69 = vector.load %arg8[%c0_27, %c0_28] : memref<64x64xf32, #tpu.memory_space<vmem>>, vector<64x64xf32>
    %cst_29 = arith.constant dense<0.000000e+00> : vector<16x64xf32>
    %70 = tpu.matmul %68, %69, %cst_29 {dimension_numbers = #tpu.dot_dimension_numbers<[1], [0], [0], [1], [0, 0, 1, 1], [], []>} : vector<16x64xf32>, vector<64x64xf32>, vector<16x64xf32> -> vector<16x64xf32>
    %c0_30 = arith.constant 0 : index
    %c0_31 = arith.constant 0 : index
    %71 = vector.load %arg9[%c0_30, %c0_31] : memref<1x64xf32, #tpu.memory_space<vmem>>, vector<1x64xf32>
    %72 = vector.broadcast %71 : vector<1x64xf32> to vector<16x64xf32>
    %73 = arith.addf %70, %72 : vector<16x64xf32>
    %74 = vector.extract_strided_slice %73 {offsets = [0, 0], sizes = [16, 32], strides = [1, 1]} : vector<16x64xf32> to vector<16x32xf32>
    %75 = vector.extract_strided_slice %73 {offsets = [0, 32], sizes = [16, 32], strides = [1, 1]} : vector<16x64xf32> to vector<16x32xf32>
    %cst_32 = arith.constant dense<0.000000e+00> : vector<16xf32>
    %76 = vector.multi_reduction <add>, %61, %cst_32 [1] : vector<16x32xf32> to vector<16xf32>
    %77 = vector.shape_cast %76 : vector<16xf32> to vector<16x1xf32>
    %cst_33 = arith.constant 3.200000e+01 : f32
    %78 = vector.broadcast %cst_33 : f32 to vector<16x1xf32>
    %79 = arith.divf %77, %78 : vector<16x1xf32>
    %80 = vector.broadcast %79 : vector<16x1xf32> to vector<16x32xf32>
    %81 = arith.subf %61, %80 : vector<16x32xf32>
    %82 = arith.mulf %81, %81 : vector<16x32xf32>
    %cst_34 = arith.constant dense<0.000000e+00> : vector<16xf32>
    %83 = vector.multi_reduction <add>, %82, %cst_34 [1] : vector<16x32xf32> to vector<16xf32>
    %84 = vector.shape_cast %83 : vector<16xf32> to vector<16x1xf32>
    %cst_35 = arith.constant 3.200000e+01 : f32
    %85 = vector.broadcast %cst_35 : f32 to vector<16x1xf32>
    %86 = arith.divf %84, %85 : vector<16x1xf32>
    %87 = vector.broadcast %79 : vector<16x1xf32> to vector<16x32xf32>
    %88 = arith.subf %61, %87 : vector<16x32xf32>
    %cst_36 = arith.constant 9.99999974E-6 : f32
    %89 = vector.broadcast %cst_36 : f32 to vector<16x1xf32>
    %90 = arith.addf %86, %89 : vector<16x1xf32>
    %91 = math.rsqrt %90 : vector<16x1xf32>
    %92 = vector.broadcast %91 : vector<16x1xf32> to vector<16x32xf32>
    %93 = arith.mulf %88, %92 : vector<16x32xf32>
    %c0_37 = arith.constant 0 : index
    %c0_38 = arith.constant 0 : index
    %94 = vector.load %arg10[%c0_37, %c0_38] : memref<1x32xf32, #tpu.memory_space<vmem>>, vector<1x32xf32>
    %95 = vector.broadcast %94 : vector<1x32xf32> to vector<16x32xf32>
    %96 = arith.mulf %93, %95 : vector<16x32xf32>
    %c0_39 = arith.constant 0 : index
    %c0_40 = arith.constant 0 : index
    %97 = vector.load %arg11[%c0_39, %c0_40] : memref<1x32xf32, #tpu.memory_space<vmem>>, vector<1x32xf32>
    %98 = vector.broadcast %97 : vector<1x32xf32> to vector<16x32xf32>
    %99 = arith.addf %96, %98 : vector<16x32xf32>
    %cst_41 = arith.constant 1.000000e+00 : f32
    %100 = vector.broadcast %cst_41 : f32 to vector<16x32xf32>
    %101 = arith.addf %100, %74 : vector<16x32xf32>
    %102 = arith.mulf %99, %101 : vector<16x32xf32>
    %103 = arith.addf %102, %75 : vector<16x32xf32>
    %104 = arith.negf %103 : vector<16x32xf32>
    %105 = math.exp %104 : vector<16x32xf32>
    %cst_42 = arith.constant 1.000000e+00 : f32
    %106 = vector.broadcast %cst_42 : f32 to vector<16x32xf32>
    %107 = arith.addf %106, %105 : vector<16x32xf32>
    %108 = arith.divf %106, %107 : vector<16x32xf32>
    %109 = arith.mulf %103, %108 : vector<16x32xf32>
    %c0_43 = arith.constant 0 : index
    %c0_44 = arith.constant 0 : index
    %110 = vector.load %arg12[%c0_43, %c0_44] : memref<32x32xf32, #tpu.memory_space<vmem>>, vector<32x32xf32>
    %cst_45 = arith.constant dense<0.000000e+00> : vector<16x32xf32>
    %111 = tpu.matmul %109, %110, %cst_45 {dimension_numbers = #tpu.dot_dimension_numbers<[1], [0], [0], [1], [0, 0, 1, 1], [], []>} : vector<16x32xf32>, vector<32x32xf32>, vector<16x32xf32> -> vector<16x32xf32>
    %c0_46 = arith.constant 0 : index
    %c0_47 = arith.constant 0 : index
    %112 = vector.load %arg13[%c0_46, %c0_47] : memref<1x32xf32, #tpu.memory_space<vmem>>, vector<1x32xf32>
    %113 = vector.broadcast %112 : vector<1x32xf32> to vector<16x32xf32>
    %114 = arith.addf %111, %113 : vector<16x32xf32>
    %115 = arith.addf %0, %114 : vector<16x32xf32>
    %c0_48 = arith.constant 0 : index
    %c0_49 = arith.constant 0 : index
    %116 = vector.load %arg14[%c0_48, %c0_49] : memref<16x32xf32, #tpu.memory_space<vmem>>, vector<16x32xf32>
    tpu.vector_store %arg14[%c0_48, %c0_49], %115 {strides = array<i32>} : memref<16x32xf32, #tpu.memory_space<vmem>>, vector<16x32xf32>,
    return
  }
}

</mosaic_0001>

<llo_original>
// kernel: temporal_self_attention.1
$region0: #{temporal_self_attention.1}
  #allocation0 [shape = 'u32[]', space=smem, size = 0x4, offset = 0x4, fixed_abs, tag = 'smem constant byte address 0x4 - core index']
  #allocation1 [shape = 'u32[72,128]{1,0:T(1,128)}', space=vmem, size = 0x9000, scoped, tag = 'internal scratch']
  %s0 = inlined_call_operand.vmem [shape: f32[16,32], index: 0, kind: input, shape index: {}]
  %s1 = inlined_call_operand.vmem [shape: f32[16,64], index: 1, kind: input, shape index: {}]
  %s2 = inlined_call_operand.vmem [shape: f32[16,16], index: 2, kind: input, shape index: {}]
  %s3 = inlined_call_operand.vmem [shape: f32[4,1,32], index: 3, kind: input, shape index: {}]
  %s4 = inlined_call_operand.vmem [shape: f32[1,32], index: 4, kind: input, shape index: {}]
  %s5 = inlined_call_operand.vmem [shape: f32[1,32], index: 5, kind: input, shape index: {}]
  %s6 = inlined_call_operand.vmem [shape: f32[32,96], index: 6, kind: input, shape index: {}]
  %s7 = inlined_call_operand.vmem [shape: f32[1,96], index: 7, kind: input, shape index: {}]
  %s8 = inlined_call_operand.vmem [shape: f32[64,64], index: 8, kind: input, shape index: {}]
  %s9 = inlined_call_operand.vmem [shape: f32[1,64], index: 9, kind: input, shape index: {}]
  %s10 = inlined_call_operand.vmem [shape: f32[1,32], index: 10, kind: input, shape index: {}]
  %s11 = inlined_call_operand.vmem [shape: f32[1,32], index: 11, kind: input, shape index: {}]
  %s12 = inlined_call_operand.vmem [shape: f32[32,32], index: 12, kind: input, shape index: {}]
  %s13 = inlined_call_operand.vmem [shape: f32[1,32], index: 13, kind: input, shape index: {}]
  %s14 = inlined_call_operand.hbm [shape: f32[16,32], index: 14, kind: output, shape index: {}]
  %s15 = sld [smem:[#allocation0]]
  $region66: #{temporal_self_attention.1} parent=0
    _
  %s17 = ssub.s32 1, %s15
  %s18 = scalar_select 0, %s17, %s15
  $region1: #{temporal_self_attention.1} parent=0
    #allocation2 [shape = 'u8[8192]{0}', space=vmem, size = 0x2000, scoped, tag = 'output window, operand 0, single buffered']
    #allocation3 [shape = 's32[1]{0}', space=sflag, size = 0x4, scoped, tag = 'scoped memory for temporal_self_attention.1']
    %19 = vsyncpa [#allocation3], 0
    // Predicated region
    $region2: #{temporal_self_attention.1} parent=1 // pred_check
      _
    $region3: #{temporal_self_attention.1} parent=1 // pred_check_branch
      %21 = sbr.rel (0) target = $region5
    $region4: #{temporal_self_attention.1} parent=1 // pred_region
      _
    $region5: #{temporal_self_attention.1} parent=1 // pred_fallthru
      _
    // Predicated region
    $region6: #{temporal_self_attention.1} parent=1 // pred_check
      _
    $region7: #{temporal_self_attention.1} parent=1 // pred_check_branch
      %23 = sbr.rel (0) target = $region9
    $region8: #{temporal_self_attention.1} parent=1 // pred_region
      _
    $region9: #{temporal_self_attention.1} parent=1 // pred_fallthru
      _
    // Predicated region
    $region10: #{temporal_self_attention.1} parent=1 // pred_check
      _
    $region11: #{temporal_self_attention.1} parent=1 // pred_check_branch
      %25 = sbr.rel (0) target = $region13
    $region12: #{temporal_self_attention.1} parent=1 // pred_region
      _
    $region13: #{temporal_self_attention.1} parent=1 // pred_fallthru
      _
    // Predicated region
    $region14: #{temporal_self_attention.1} parent=1 // pred_check
      _
    $region15: #{temporal_self_attention.1} parent=1 // pred_check_branch
      %27 = sbr.rel (0) target = $region17
    $region16: #{temporal_self_attention.1} parent=1 // pred_region
      _
    $region17: #{temporal_self_attention.1} parent=1 // pred_fallthru
      _
    // Predicated region
    $region18: #{temporal_self_attention.1} parent=1 // pred_check
      _
    $region19: #{temporal_self_attention.1} parent=1 // pred_check_branch
      %29 = sbr.rel (0) target = $region21
    $region20: #{temporal_self_attention.1} parent=1 // pred_region
      _
    $region21: #{temporal_self_attention.1} parent=1 // pred_fallthru
      _
    // Predicated region
    $region22: #{temporal_self_attention.1} parent=1 // pred_check
      _
    $region23: #{temporal_self_attention.1} parent=1 // pred_check_branch
      %31 = sbr.rel (0) target = $region25
    $region24: #{temporal_self_attention.1} parent=1 // pred_region
      _
    $region25: #{temporal_self_attention.1} parent=1 // pred_fallthru
      _
    // Predicated region
    $region26: #{temporal_self_attention.1} parent=1 // pred_check
      _
    $region27: #{temporal_self_attention.1} parent=1 // pred_check_branch
      %33 = sbr.rel (0) target = $region29
    $region28: #{temporal_self_attention.1} parent=1 // pred_region
      _
    $region29: #{temporal_self_attention.1} parent=1 // pred_fallthru
      _
    // Predicated region
    $region30: #{temporal_self_attention.1} parent=1 // pred_check
      _
    $region31: #{temporal_self_attention.1} parent=1 // pred_check_branch
      %35 = sbr.rel (0) target = $region33
    $region32: #{temporal_self_attention.1} parent=1 // pred_region
      _
    $region33: #{temporal_self_attention.1} parent=1 // pred_fallthru
      _
    // Predicated region
    $region34: #{temporal_self_attention.1} parent=1 // pred_check
      _
    $region35: #{temporal_self_attention.1} parent=1 // pred_check_branch
      %37 = sbr.rel (0) target = $region37
    $region36: #{temporal_self_attention.1} parent=1 // pred_region
      _
    $region37: #{temporal_self_attention.1} parent=1 // pred_fallthru
      _
    // Predicated region
    $region38: #{temporal_self_attention.1} parent=1 // pred_check
      _
    $region39: #{temporal_self_attention.1} parent=1 // pred_check_branch
      %39 = sbr.rel (0) target = $region41
    $region40: #{temporal_self_attention.1} parent=1 // pred_region
      _
    $region41: #{temporal_self_attention.1} parent=1 // pred_fallthru
      _
    // Predicated region
    $region42: #{temporal_self_attention.1} parent=1 // pred_check
      _
    $region43: #{temporal_self_attention.1} parent=1 // pred_check_branch
      %41 = sbr.rel (0) target = $region45
    $region44: #{temporal_self_attention.1} parent=1 // pred_region
      _
    $region45: #{temporal_self_attention.1} parent=1 // pred_fallthru
      _
    // Predicated region
    $region46: #{temporal_self_attention.1} parent=1 // pred_check
      _
    $region47: #{temporal_self_attention.1} parent=1 // pred_check_branch
      %43 = sbr.rel (0) target = $region49
    $region48: #{temporal_self_attention.1} parent=1 // pred_region
      _
    $region49: #{temporal_self_attention.1} parent=1 // pred_fallthru
      _
    // Predicated region
    $region50: #{temporal_self_attention.1} parent=1 // pred_check
      _
    $region51: #{temporal_self_attention.1} parent=1 // pred_check_branch
      %45 = sbr.rel (0) target = $region53
    $region52: #{temporal_self_attention.1} parent=1 // pred_region
      _
    $region53: #{temporal_self_attention.1} parent=1 // pred_fallthru
      _
    // Predicated region
    $region54: #{temporal_self_attention.1} parent=1 // pred_check
      _
    $region55: #{temporal_self_attention.1} parent=1 // pred_check_branch
      %47 = sbr.rel (0) target = $region57
    $region56: #{temporal_self_attention.1} parent=1 // pred_region
      _
    $region57: #{temporal_self_attention.1} parent=1 // pred_fallthru
      _
    %v48 = vld [vmem:[%s0] sm:$0xff]
    %v49 = vld [vmem:[%s0 + $0x8] sm:$0xff]
    %v50 = vld [vmem:[%s3] sm:$0x1]
    %v51 = vld [vmem:[%s3 + $0x1] sm:$0x1]
    %v52 = vld [vmem:[%s3 + $0x2] sm:$0x1]
    %v53 = vld [vmem:[%s3 + $0x3] sm:$0x1]
    %vm54 = vcmask 261120
    %v55 = vsel %vm54, %v48, 0.0
    %56 = vadd.xlane.f32.xlu0 %v55
    %v57 = vpop.xlane.xlu0 %56
    %v58 = vsel %vm54, %v49, 0.0
    %59 = vadd.xlane.f32.xlu0 %v58
    %v60 = vpop.xlane.xlu0 %59
    %v61 = vrcp.pop 32.0
    %v62 = vmul.f32 32.0, %v61
    %v63 = vsub.f32 1.0, %v62
    %v64 = vmul.f32 %v61, %v63
    %v65 = vadd.f32 %v61, %v64
    %vm66 = vweird.f32 %v61
    %v67 = vsel %vm66, %v61, %v65
    %v68 = vmul.f32 %v57, %v67
    %v69 = vmul.f32 %v60, %v67
    %v70 = vsub.f32 %v48, %v68
    %v71 = vsub.f32 %v49, %v69
    %v72 = vmul.f32 %v70, %v70
    %v73 = vmul.f32 %v71, %v71
    %v74 = vsel %vm54, %v72, 0.0
    %75 = vadd.xlane.f32.xlu0 %v74
    %v76 = vpop.xlane.xlu0 %75
    %v77 = vsel %vm54, %v73, 0.0
    %78 = vadd.xlane.f32.xlu0 %v77
    %v79 = vpop.xlane.xlu0 %78
    %v80 = vmul.f32 %v76, %v67
    %v81 = vmul.f32 %v79, %v67
    %v82 = vadd.f32 %v80, 1e-05
    %v83 = vadd.f32 %v81, 1e-05
    %v84 = vrsqrt.pop %v82
    %v85 = vmul.f32 %v84, %v82
    %v86 = vmul.f32 %v85, %v84
    %v87 = vmul.f32 0.5, %v86
    %v88 = vsub.f32 1.5, %v87
    %v89 = vmul.f32 %v84, %v88
    %vm90 = vweird.f32 %v82
    %vm91 = vweird.f32 %v84
    %vm92 = vmor %vm90, %vm91
    %v93 = vsel %vm92, %v84, %v89
    %v94 = vrsqrt.pop %v83
    %v95 = vmul.f32 %v94, %v83
    %v96 = vmul.f32 %v95, %v94
    %v97 = vmul.f32 0.5, %v96
    %v98 = vsub.f32 1.5, %v97
    %v99 = vmul.f32 %v94, %v98
    %vm100 = vweird.f32 %v83
    %vm101 = vweird.f32 %v94
    %vm102 = vmor %vm100, %vm101
    %v103 = vsel %vm102, %v94, %v99
    %v104 = vmul.f32 %v70, %v93
    %v105 = vmul.f32 %v71, %v103
    %v106 = vld [vmem:[%s4] sm:$0x1]
    %v108 = vperm.slane %v106, 0
    %v110 = vmul.f32 %v104, %v108
    %v111 = vmul.f32 %v105, %v108
    %v112 = vld [vmem:[%s5] sm:$0x1]
    %v114 = vperm.slane %v112, 0
    %v116 = vadd.f32 %v110, %v114
    %v117 = vadd.f32 %v111, %v114
    %v118 = vld [vmem:[%s6] sm:$0xff]
    %v119 = vld [vmem:[%s6 + $0x8] sm:$0xff]
    %v120 = vld [vmem:[%s6 + $0x10] sm:$0xff]
    %v121 = vld [vmem:[%s6 + $0x18] sm:$0xff]
    %v122 = vld [vmem:[%s7] sm:$0x1]
    %v124 = vperm.slane %v122, 0
    %v127 = vsel %vm54, %v116, 0
    %v130 = vsel %vm54, %v117, 0
    %132 = vmatpush.msra.mxu0 0.0
    %133 = vmatpush.msra.mxu0 0.0
    %134 = vmatpush.msra.mxu0 0.0
    %135 = vmatpush.msra.mxu0 0.0
    %136 = vmatpush.msra.mxu0 0.0
    %137 = vmatpush.msra.mxu0 0.0
    %138 = vmatpush.msra.mxu0 0.0
    %139 = vmatpush.msra.mxu0 0.0
    %140 = vmatpush.msra.mxu0 0.0
    %141 = vmatpush.msra.mxu0 0.0
    %142 = vmatpush.msra.mxu0 0.0
    %143 = vmatpush.msra.mxu0 0.0
    %144 = vmatpush.msra.mxu0 %v121
    %145 = vmatpush.msra.mxu0 %v120
    %146 = vmatpush.msra.mxu0 %v119
    %147 = vmatpush.msra.mxu0 %v118
    %148 = vmatmul.f32.gmra.mxu0 %v127
    %v149 = vpop.f32.mrf.mxu0
    %v150 = vadd.f32 %v124, %v149
    %151 = vmatmul.f32.gmra.mxu0 %v130
    %v152 = vpop.f32.mrf.mxu0
    %v153 = vadd.f32 %v124, %v152
    %154 = vdwg.mxu0
    %v159 = vperm.slane %v50, 0
    %v160 = vperm.slane %v51, 0
    %v161 = vperm.slane %v52, 0
    %v162 = vperm.slane %v53, 0
    %v167 = vmul.f32 %v150, %v159
    %v168 = vmul.f32 %v153, %v159
    %v169 = vmul.f32 %v150, %v160
    %v170 = vmul.f32 %v153, %v160
    %v171 = vmul.f32 %v150, %v161
    %v172 = vmul.f32 %v153, %v161
    %v173 = vmul.f32 %v150, %v162
    %v174 = vmul.f32 %v153, %v162
    %175 = vrot.lane.b32.xlu0 %v159, 64
    %v176 = vpop.permute.xlu0 %175
    %177 = vrot.lane.b32.xlu0 %v160, 64
    %v178 = vpop.permute.xlu0 %177
    %179 = vrot.lane.b32.xlu0 %v161, 64
    %v180 = vpop.permute.xlu0 %179
    %181 = vrot.lane.b32.xlu0 %v162, 64
    %v182 = vpop.permute.xlu0 %181
    %v187 = vmul.f32 %v150, %v176
    %v188 = vmul.f32 %v153, %v176
    %v189 = vmul.f32 %v150, %v178
    %v190 = vmul.f32 %v153, %v178
    %v191 = vmul.f32 %v150, %v180
    %v192 = vmul.f32 %v153, %v180
    %v193 = vmul.f32 %v150, %v182
    %v194 = vmul.f32 %v153, %v182
    %v195 = vld [vmem:[%s2] sm:$0xff]
    %v196 = vld [vmem:[%s2 + $0x8] sm:$0xff]
    %199 = vrot.lane.b32.xlu0 %v150, 96
    %v200 = vpop.permute.xlu0 %199
    %201 = vrot.lane.b32.xlu0 %v153, 96
    %v202 = vpop.permute.xlu0 %201
    %v204 = vsel %vm54, %v167, 0
    %v207 = vsel %vm54, %v168, 0
    %v209 = vsel %vm54, %v200, 0
    %v211 = vsel %vm54, %v202, 0
    %213 = vmatpush.xpose.msra.mxu0 0.0
    %214 = vmatpush.xpose.msra.mxu0 0.0
    %215 = vmatpush.xpose.msra.mxu0 0.0
    %216 = vmatpush.xpose.msra.mxu0 0.0
    %217 = vmatpush.xpose.msra.mxu0 0.0
    %218 = vmatpush.xpose.msra.mxu0 0.0
    %219 = vmatpush.xpose.msra.mxu0 0.0
    %220 = vmatpush.xpose.msra.mxu0 0.0
    %221 = vmatpush.xpose.msra.mxu0 0.0
    %222 = vmatpush.xpose.msra.mxu0 0.0
    %223 = vmatpush.xpose.msra.mxu0 0.0
    %224 = vmatpush.xpose.msra.mxu0 0.0
    %225 = vmatpush.xpose.msra.mxu0 0.0
    %226 = vmatpush.xpose.msra.mxu0 0.0
    %227 = vmatpush.xpose.msra.mxu0 %v211
    %228 = vmatpush.xpose.msra.mxu0 %v209
    %229 = vmatmul.f32.gmra.mxu0 %v204
    %v230 = vpop.f32.mrf.mxu0
    %v231 = vadd.f32 %v195, %v230
    %232 = vmatmul.f32.gmra.mxu0 %v207
    %v233 = vpop.f32.mrf.mxu0
    %v234 = vadd.f32 %v196, %v233
    %235 = vdwg.mxu0
    %v237 = vsel %vm54, %v169, 0
    %v240 = vsel %vm54, %v170, 0
    %242 = vmatpush.xpose.msra.mxu0 0.0
    %243 = vmatpush.xpose.msra.mxu0 0.0
    %244 = vmatpush.xpose.msra.mxu0 0.0
    %245 = vmatpush.xpose.msra.mxu0 0.0
    %246 = vmatpush.xpose.msra.mxu0 0.0
    %247 = vmatpush.xpose.msra.mxu0 0.0
    %248 = vmatpush.xpose.msra.mxu0 0.0
    %249 = vmatpush.xpose.msra.mxu0 0.0
    %250 = vmatpush.xpose.msra.mxu0 0.0
    %251 = vmatpush.xpose.msra.mxu0 0.0
    %252 = vmatpush.xpose.msra.mxu0 0.0
    %253 = vmatpush.xpose.msra.mxu0 0.0
    %254 = vmatpush.xpose.msra.mxu0 0.0
    %255 = vmatpush.xpose.msra.mxu0 0.0
    %256 = vmatpush.xpose.msra.mxu0 %v211
    %257 = vmatpush.xpose.msra.mxu0 %v209
    %258 = vmatmul.f32.gmra.mxu0 %v237
    %v259 = vpop.f32.mrf.mxu0
    %v260 = vadd.f32 %v195, %v259
    %261 = vmatmul.f32.gmra.mxu0 %v240
    %v262 = vpop.f32.mrf.mxu0
    %v263 = vadd.f32 %v196, %v262
    %264 = vdwg.mxu0
    %v266 = vsel %vm54, %v171, 0
    %v269 = vsel %vm54, %v172, 0
    %271 = vmatpush.xpose.msra.mxu0 0.0
    %272 = vmatpush.xpose.msra.mxu0 0.0
    %273 = vmatpush.xpose.msra.mxu0 0.0
    %274 = vmatpush.xpose.msra.mxu0 0.0
    %275 = vmatpush.xpose.msra.mxu0 0.0
    %276 = vmatpush.xpose.msra.mxu0 0.0
    %277 = vmatpush.xpose.msra.mxu0 0.0
    %278 = vmatpush.xpose.msra.mxu0 0.0
    %279 = vmatpush.xpose.msra.mxu0 0.0
    %280 = vmatpush.xpose.msra.mxu0 0.0
    %281 = vmatpush.xpose.msra.mxu0 0.0
    %282 = vmatpush.xpose.msra.mxu0 0.0
    %283 = vmatpush.xpose.msra.mxu0 0.0
    %284 = vmatpush.xpose.msra.mxu0 0.0
    %285 = vmatpush.xpose.msra.mxu0 %v211
    %286 = vmatpush.xpose.msra.mxu0 %v209
    %287 = vmatmul.f32.gmra.mxu0 %v266
    %v288 = vpop.f32.mrf.mxu0
    %v289 = vadd.f32 %v195, %v288
    %290 = vmatmul.f32.gmra.mxu0 %v269
    %v291 = vpop.f32.mrf.mxu0
    %v292 = vadd.f32 %v196, %v291
    %293 = vdwg.mxu0
    %v295 = vsel %vm54, %v173, 0
    %v298 = vsel %vm54, %v174, 0
    %300 = vmatpush.xpose.msra.mxu0 0.0
    %301 = vmatpush.xpose.msra.mxu0 0.0
    %302 = vmatpush.xpose.msra.mxu0 0.0
    %303 = vmatpush.xpose.msra.mxu0 0.0
    %304 = vmatpush.xpose.msra.mxu0 0.0
    %305 = vmatpush.xpose.msra.mxu0 0.0
    %306 = vmatpush.xpose.msra.mxu0 0.0
    %307 = vmatpush.xpose.msra.mxu0 0.0
    %308 = vmatpush.xpose.msra.mxu0 0.0
    %309 = vmatpush.xpose.msra.mxu0 0.0
    %310 = vmatpush.xpose.msra.mxu0 0.0
    %311 = vmatpush.xpose.msra.mxu0 0.0
    %312 = vmatpush.xpose.msra.mxu0 0.0
    %313 = vmatpush.xpose.msra.mxu0 0.0
    %314 = vmatpush.xpose.msra.mxu0 %v211
    %315 = vmatpush.xpose.msra.mxu0 %v209
    %316 = vmatmul.f32.gmra.mxu0 %v295
    %v317 = vpop.f32.mrf.mxu0
    %v318 = vadd.f32 %v195, %v317
    %319 = vmatmul.f32.gmra.mxu0 %v298
    %v320 = vpop.f32.mrf.mxu0
    %v321 = vadd.f32 %v196, %v320
    %322 = vdwg.mxu0
    %vm323 = vcmask 130048
    %v324 = vsel %vm323, %v231, -inf
    %325 = vmax.xlane.f32.xlu0 %v324
    %v326 = vpop.xlane.xlu0 %325
    %v327 = vsel %vm323, %v234, -inf
    %328 = vmax.xlane.f32.xlu0 %v327
    %v329 = vpop.xlane.xlu0 %328
    %v330 = vsel %vm323, %v260, -inf
    %331 = vmax.xlane.f32.xlu0 %v330
    %v332 = vpop.xlane.xlu0 %331
    %v333 = vsel %vm323, %v263, -inf
    %334 = vmax.xlane.f32.xlu0 %v333
    %v335 = vpop.xlane.xlu0 %334
    %v336 = vsel %vm323, %v289, -inf
    %337 = vmax.xlane.f32.xlu0 %v336
    %v338 = vpop.xlane.xlu0 %337
    %v339 = vsel %vm323, %v292, -inf
    %340 = vmax.xlane.f32.xlu0 %v339
    %v341 = vpop.xlane.xlu0 %340
    %v342 = vsel %vm323, %v318, -inf
    %343 = vmax.xlane.f32.xlu0 %v342
    %v344 = vpop.xlane.xlu0 %343
    %v345 = vsel %vm323, %v321, -inf
    %346 = vmax.xlane.f32.xlu0 %v345
    %v347 = vpop.xlane.xlu0 %346
    %v348 = vsub.f32 %v231, %v326
    %v349 = vsub.f32 %v234, %v329
    %v350 = vsub.f32 %v260, %v332
    %v351 = vsub.f32 %v263, %v335
    %v352 = vsub.f32 %v289, %v338
    %v353 = vsub.f32 %v292, %v341
    %v354 = vsub.f32 %v318, %v344
    %v355 = vsub.f32 %v321, %v347
    %v356 = vmul.f32 %v348, 1.442695
    %v357 = vpow.pop %v356
    %v358 = vmul.f32 %v349, 1.442695
    %v359 = vpow.pop %v358
    %v360 = vmul.f32 %v350, 1.442695
    %v361 = vpow.pop %v360
    %v362 = vmul.f32 %v351, 1.442695
    %v363 = vpow.pop %v362
    %v364 = vmul.f32 %v352, 1.442695
    %v365 = vpow.pop %v364
    %v366 = vmul.f32 %v353, 1.442695
    %v367 = vpow.pop %v366
    %v368 = vmul.f32 %v354, 1.442695
    %v369 = vpow.pop %v368
    %v370 = vmul.f32 %v355, 1.442695
    %v371 = vpow.pop %v370
    %v372 = vsel %vm323, %v357, 0.0
    %373 = vadd.xlane.f32.xlu0 %v372
    %v374 = vpop.xlane.xlu0 %373
    %v375 = vsel %vm323, %v359, 0.0
    %376 = vadd.xlane.f32.xlu0 %v375
    %v377 = vpop.xlane.xlu0 %376
    %v378 = vsel %vm323, %v361, 0.0
    %379 = vadd.xlane.f32.xlu0 %v378
    %v380 = vpop.xlane.xlu0 %379
    %v381 = vsel %vm323, %v363, 0.0
    %382 = vadd.xlane.f32.xlu0 %v381
    %v383 = vpop.xlane.xlu0 %382
    %v384 = vsel %vm323, %v365, 0.0
    %385 = vadd.xlane.f32.xlu0 %v384
    %v386 = vpop.xlane.xlu0 %385
    %v387 = vsel %vm323, %v367, 0.0
    %388 = vadd.xlane.f32.xlu0 %v387
    %v389 = vpop.xlane.xlu0 %388
    %v390 = vsel %vm323, %v369, 0.0
    %391 = vadd.xlane.f32.xlu0 %v390
    %v392 = vpop.xlane.xlu0 %391
    %v393 = vsel %vm323, %v371, 0.0
    %394 = vadd.xlane.f32.xlu0 %v393
    %v395 = vpop.xlane.xlu0 %394
    %v396 = vrcp.pop %v374
    %v397 = vrcp.pop %v377
    %v398 = vrcp.pop %v380
    %v399 = vrcp.pop %v383
    %v400 = vrcp.pop %v386
    %v401 = vrcp.pop %v389
    %v402 = vrcp.pop %v392
    %v403 = vrcp.pop %v395
    %v404 = vmul.f32 %v357, %v396
    %v405 = vmul.f32 %v359, %v397
    %v406 = vmul.f32 %v361, %v398
    %v407 = vmul.f32 %v363, %v399
    %v408 = vmul.f32 %v365, %v400
    %v409 = vmul.f32 %v367, %v401
    %v410 = vmul.f32 %v369, %v402
    %v411 = vmul.f32 %v371, %v403
    %414 = vrot.lane.b32.xlu0 %v187, 64
    %v415 = vpop.permute.xlu0 %414
    %416 = vrot.lane.b32.xlu0 %v188, 64
    %v417 = vpop.permute.xlu0 %416
    %v421 = vsel %vm323, %v404, 0
    %v424 = vsel %vm323, %v405, 0
    %426 = vmatpush.msra.mxu0 0.0
    %427 = vmatpush.msra.mxu0 0.0
    %428 = vmatpush.msra.mxu0 0.0
    %429 = vmatpush.msra.mxu0 0.0
    %430 = vmatpush.msra.mxu0 0.0
    %431 = vmatpush.msra.mxu0 0.0
    %432 = vmatpush.msra.mxu0 0.0
    %433 = vmatpush.msra.mxu0 0.0
    %434 = vmatpush.msra.mxu0 0.0
    %435 = vmatpush.msra.mxu0 0.0
    %436 = vmatpush.msra.mxu0 0.0
    %437 = vmatpush.msra.mxu0 0.0
    %438 = vmatpush.msra.mxu0 0.0
    %439 = vmatpush.msra.mxu0 0.0
    %440 = vmatpush.msra.mxu0 %v417
    %441 = vmatpush.msra.mxu0 %v415
    %442 = vmatmul.f32.gmra.mxu0 %v421
    %v443 = vpop.f32.mrf.mxu0
    %v444 = vadd.f32 0.0, %v443
    %445 = vmatmul.f32.gmra.mxu0 %v424
    %v446 = vpop.f32.mrf.mxu0
    %v447 = vadd.f32 0.0, %v446
    %448 = vdwg.mxu0
    %451 = vrot.lane.b32.xlu0 %v189, 64
    %v452 = vpop.permute.xlu0 %451
    %453 = vrot.lane.b32.xlu0 %v190, 64
    %v454 = vpop.permute.xlu0 %453
    %v458 = vsel %vm323, %v406, 0
    %v461 = vsel %vm323, %v407, 0
    %463 = vmatpush.msra.mxu0 0.0
    %464 = vmatpush.msra.mxu0 0.0
    %465 = vmatpush.msra.mxu0 0.0
    %466 = vmatpush.msra.mxu0 0.0
    %467 = vmatpush.msra.mxu0 0.0
    %468 = vmatpush.msra.mxu0 0.0
    %469 = vmatpush.msra.mxu0 0.0
    %470 = vmatpush.msra.mxu0 0.0
    %471 = vmatpush.msra.mxu0 0.0
    %472 = vmatpush.msra.mxu0 0.0
    %473 = vmatpush.msra.mxu0 0.0
    %474 = vmatpush.msra.mxu0 0.0
    %475 = vmatpush.msra.mxu0 0.0
    %476 = vmatpush.msra.mxu0 0.0
    %477 = vmatpush.msra.mxu0 %v454
    %478 = vmatpush.msra.mxu0 %v452
    %479 = vmatmul.f32.gmra.mxu0 %v458
    %v480 = vpop.f32.mrf.mxu0
    %v481 = vadd.f32 0.0, %v480
    %482 = vmatmul.f32.gmra.mxu0 %v461
    %v483 = vpop.f32.mrf.mxu0
    %v484 = vadd.f32 0.0, %v483
    %485 = vdwg.mxu0
    %488 = vrot.lane.b32.xlu0 %v191, 64
    %v489 = vpop.permute.xlu0 %488
    %490 = vrot.lane.b32.xlu0 %v192, 64
    %v491 = vpop.permute.xlu0 %490
    %v495 = vsel %vm323, %v408, 0
    %v498 = vsel %vm323, %v409, 0
    %500 = vmatpush.msra.mxu0 0.0
    %501 = vmatpush.msra.mxu0 0.0
    %502 = vmatpush.msra.mxu0 0.0
    %503 = vmatpush.msra.mxu0 0.0
    %504 = vmatpush.msra.mxu0 0.0
    %505 = vmatpush.msra.mxu0 0.0
    %506 = vmatpush.msra.mxu0 0.0
    %507 = vmatpush.msra.mxu0 0.0
    %508 = vmatpush.msra.mxu0 0.0
    %509 = vmatpush.msra.mxu0 0.0
    %510 = vmatpush.msra.mxu0 0.0
    %511 = vmatpush.msra.mxu0 0.0
    %512 = vmatpush.msra.mxu0 0.0
    %513 = vmatpush.msra.mxu0 0.0
    %514 = vmatpush.msra.mxu0 %v491
    %515 = vmatpush.msra.mxu0 %v489
    %516 = vmatmul.f32.gmra.mxu0 %v495
    %v517 = vpop.f32.mrf.mxu0
    %v518 = vadd.f32 0.0, %v517
    %519 = vmatmul.f32.gmra.mxu0 %v498
    %v520 = vpop.f32.mrf.mxu0
    %v521 = vadd.f32 0.0, %v520
    %522 = vdwg.mxu0
    %525 = vrot.lane.b32.xlu0 %v193, 64
    %v526 = vpop.permute.xlu0 %525
    %527 = vrot.lane.b32.xlu0 %v194, 64
    %v528 = vpop.permute.xlu0 %527
    %v532 = vsel %vm323, %v410, 0
    %v535 = vsel %vm323, %v411, 0
    %537 = vmatpush.msra.mxu0 0.0
    %538 = vmatpush.msra.mxu0 0.0
    %539 = vmatpush.msra.mxu0 0.0
    %540 = vmatpush.msra.mxu0 0.0
    %541 = vmatpush.msra.mxu0 0.0
    %542 = vmatpush.msra.mxu0 0.0
    %543 = vmatpush.msra.mxu0 0.0
    %544 = vmatpush.msra.mxu0 0.0
    %545 = vmatpush.msra.mxu0 0.0
    %546 = vmatpush.msra.mxu0 0.0
    %547 = vmatpush.msra.mxu0 0.0
    %548 = vmatpush.msra.mxu0 0.0
    %549 = vmatpush.msra.mxu0 0.0
    %550 = vmatpush.msra.mxu0 0.0
    %551 = vmatpush.msra.mxu0 %v528
    %552 = vmatpush.msra.mxu0 %v526
    %553 = vmatmul.f32.gmra.mxu0 %v532
    %v554 = vpop.f32.mrf.mxu0
    %v555 = vadd.f32 0.0, %v554
    %556 = vmatmul.f32.gmra.mxu0 %v535
    %v557 = vpop.f32.mrf.mxu0
    %v558 = vadd.f32 0.0, %v557
    %559 = vdwg.mxu0
    %v560 = vsel %vm54, %v444, 0.0
    %v561 = vsel %vm54, %v481, 0.0
    %v562 = vadd.f32 %v560, %v561
    %v563 = vsel %vm54, %v518, 0.0
    %v564 = vadd.f32 %v562, %v563
    %v565 = vsel %vm54, %v555, 0.0
    %v566 = vadd.f32 %v564, %v565
    %v567 = vsel %vm54, %v447, 0.0
    %v568 = vsel %vm54, %v484, 0.0
    %v569 = vadd.f32 %v567, %v568
    %v570 = vsel %vm54, %v521, 0.0
    %v571 = vadd.f32 %v569, %v570
    %v572 = vsel %vm54, %v558, 0.0
    %v573 = vadd.f32 %v571, %v572
    %v574 = vld [vmem:[%s1] sm:$0xff]
    %v575 = vld [vmem:[%s1 + $0x8] sm:$0xff]
    %v576 = vxor.u32 %v574, 2147483648
    %v577 = vxor.u32 %v575, 2147483648
    %v578 = vmul.f32 %v576, 1.442695
    %v579 = vpow.pop %v578
    %v580 = vmul.f32 %v577, 1.442695
    %v581 = vpow.pop %v580
    %v582 = vadd.f32 %v579, 1.0
    %v583 = vadd.f32 %v581, 1.0
    %v584 = vrcp.pop %v582
    %v585 = vmul.f32 %v582, %v584
    %v586 = vsub.f32 1.0, %v585
    %v587 = vmul.f32 %v584, %v586
    %v588 = vadd.f32 %v584, %v587
    %vm589 = vweird.f32 %v582
    %vm590 = vweird.f32 %v584
    %vm591 = vmor %vm589, %vm590
    %v592 = vsel %vm591, %v584, %v588
    %v593 = vand.u32 2147483647, %v582
    %vm594 = vcmp.eq.f32.partialorder %v593, 8.507059e+37
    %v595 = vand.u32 %v582, 2147483648
    %v596 = vor.u32 1.1754944e-38, %v595
    %v597 = vsel %vm594, %v596, %v592
    %v598 = vmul.f32 1.0, %v597
    %v599 = vrcp.pop %v583
    %v600 = vmul.f32 %v583, %v599
    %v601 = vsub.f32 1.0, %v600
    %v602 = vmul.f32 %v599, %v601
    %v603 = vadd.f32 %v599, %v602
    %vm604 = vweird.f32 %v583
    %vm605 = vweird.f32 %v599
    %vm606 = vmor %vm604, %vm605
    %v607 = vsel %vm606, %v599, %v603
    %v608 = vand.u32 2147483647, %v583
    %vm609 = vcmp.eq.f32.partialorder %v608, 8.507059e+37
    %v610 = vand.u32 %v583, 2147483648
    %v611 = vor.u32 1.1754944e-38, %v610
    %v612 = vsel %vm609, %v611, %v607
    %v613 = vmul.f32 1.0, %v612
    %v614 = vmul.f32 %v574, %v598
    %v615 = vmul.f32 %v575, %v613
    %v616 = vld [vmem:[%s8] sm:$0xff]
    %v617 = vld [vmem:[%s8 + $0x8] sm:$0xff]
    %v618 = vld [vmem:[%s8 + $0x10] sm:$0xff]
    %v619 = vld [vmem:[%s8 + $0x18] sm:$0xff]
    %v620 = vld [vmem:[%s8 + $0x20] sm:$0xff]
    %v621 = vld [vmem:[%s8 + $0x28] sm:$0xff]
    %v622 = vld [vmem:[%s8 + $0x30] sm:$0xff]
    %v623 = vld [vmem:[%s8 + $0x38] sm:$0xff]
    %v624 = vld [vmem:[%s9] sm:$0x1]
    %v626 = vperm.slane %v624, 0
    %vm628 = vcmask 523264
    %v630 = vsel %vm628, %v614, 0
    %v633 = vsel %vm628, %v615, 0
    %635 = vmatpush.msra.mxu0 0.0
    %636 = vmatpush.msra.mxu0 0.0
    %637 = vmatpush.msra.mxu0 0.0
    %638 = vmatpush.msra.mxu0 0.0
    %639 = vmatpush.msra.mxu0 0.0
    %640 = vmatpush.msra.mxu0 0.0
    %641 = vmatpush.msra.mxu0 0.0
    %642 = vmatpush.msra.mxu0 0.0
    %643 = vmatpush.msra.mxu0 %v623
    %644 = vmatpush.msra.mxu0 %v622
    %645 = vmatpush.msra.mxu0 %v621
    %646 = vmatpush.msra.mxu0 %v620
    %647 = vmatpush.msra.mxu0 %v619
    %648 = vmatpush.msra.mxu0 %v618
    %649 = vmatpush.msra.mxu0 %v617
    %650 = vmatpush.msra.mxu0 %v616
    %651 = vmatmul.f32.gmra.mxu0 %v630
    %v652 = vpop.f32.mrf.mxu0
    %v653 = vadd.f32 %v626, %v652
    %654 = vmatmul.f32.gmra.mxu0 %v633
    %v655 = vpop.f32.mrf.mxu0
    %v656 = vadd.f32 %v626, %v655
    %657 = vdwg.mxu0
    %v658 = vsel %vm54, %v566, 0.0
    %659 = vadd.xlane.f32.xlu0 %v658
    %v660 = vpop.xlane.xlu0 %659
    %v661 = vsel %vm54, %v573, 0.0
    %662 = vadd.xlane.f32.xlu0 %v661
    %v663 = vpop.xlane.xlu0 %662
    %v664 = vmul.f32 %v660, %v67
    %v665 = vmul.f32 %v663, %v67
    %v666 = vsub.f32 %v566, %v664
    %v667 = vsub.f32 %v573, %v665
    %v668 = vmul.f32 %v666, %v666
    %v669 = vmul.f32 %v667, %v667
    %v670 = vsel %vm54, %v668, 0.0
    %671 = vadd.xlane.f32.xlu0 %v670
    %v672 = vpop.xlane.xlu0 %671
    %v673 = vsel %vm54, %v669, 0.0
    %674 = vadd.xlane.f32.xlu0 %v673
    %v675 = vpop.xlane.xlu0 %674
    %v676 = vmul.f32 %v672, %v67
    %v677 = vmul.f32 %v675, %v67
    %v678 = vadd.f32 %v676, 1e-05
    %v679 = vadd.f32 %v677, 1e-05
    %v680 = vrsqrt.pop %v678
    %v681 = vmul.f32 %v680, %v678
    %v682 = vmul.f32 %v681, %v680
    %v683 = vmul.f32 0.5, %v682
    %v684 = vsub.f32 1.5, %v683
    %v685 = vmul.f32 %v680, %v684
    %vm686 = vweird.f32 %v678
    %vm687 = vweird.f32 %v680
    %vm688 = vmor %vm686, %vm687
    %v689 = vsel %vm688, %v680, %v685
    %v690 = vrsqrt.pop %v679
    %v691 = vmul.f32 %v690, %v679
    %v692 = vmul.f32 %v691, %v690
    %v693 = vmul.f32 0.5, %v692
    %v694 = vsub.f32 1.5, %v693
    %v695 = vmul.f32 %v690, %v694
    %vm696 = vweird.f32 %v679
    %vm697 = vweird.f32 %v690
    %vm698 = vmor %vm696, %vm697
    %v699 = vsel %vm698, %v690, %v695
    %v700 = vmul.f32 %v666, %v689
    %v701 = vmul.f32 %v667, %v699
    %v702 = vld [vmem:[%s10] sm:$0x1]
    %v704 = vperm.slane %v702, 0
    %v706 = vmul.f32 %v700, %v704
    %v707 = vmul.f32 %v701, %v704
    %v708 = vld [vmem:[%s11] sm:$0x1]
    %v710 = vperm.slane %v708, 0
    %v712 = vadd.f32 %v706, %v710
    %v713 = vadd.f32 %v707, %v710
    %v714 = vadd.f32 %v653, 1.0
    %v715 = vadd.f32 %v656, 1.0
    %v716 = vmul.f32 %v712, %v714
    %v717 = vmul.f32 %v713, %v715
    %720 = vrot.lane.b32.xlu0 %v653, 96
    %v721 = vpop.permute.xlu0 %720
    %722 = vrot.lane.b32.xlu0 %v656, 96
    %v723 = vpop.permute.xlu0 %722
    %v726 = vadd.f32 %v716, %v721
    %v727 = vadd.f32 %v717, %v723
    %v728 = vxor.u32 %v726, 2147483648
    %v729 = vxor.u32 %v727, 2147483648
    %v730 = vmul.f32 %v728, 1.442695
    %v731 = vpow.pop %v730
    %v732 = vmul.f32 %v729, 1.442695
    %v733 = vpow.pop %v732
    %v734 = vadd.f32 %v731, 1.0
    %v735 = vadd.f32 %v733, 1.0
    %v736 = vrcp.pop %v734
    %v737 = vmul.f32 %v734, %v736
    %v738 = vsub.f32 1.0, %v737
    %v739 = vmul.f32 %v736, %v738
    %v740 = vadd.f32 %v736, %v739
    %vm741 = vweird.f32 %v734
    %vm742 = vweird.f32 %v736
    %vm743 = vmor %vm741, %vm742
    %v744 = vsel %vm743, %v736, %v740
    %v745 = vand.u32 2147483647, %v734
    %vm746 = vcmp.eq.f32.partialorder %v745, 8.507059e+37
    %v747 = vand.u32 %v734, 2147483648
    %v748 = vor.u32 1.1754944e-38, %v747
    %v749 = vsel %vm746, %v748, %v744
    %v750 = vmul.f32 1.0, %v749
    %v751 = vrcp.pop %v735
    %v752 = vmul.f32 %v735, %v751
    %v753 = vsub.f32 1.0, %v752
    %v754 = vmul.f32 %v751, %v753
    %v755 = vadd.f32 %v751, %v754
    %vm756 = vweird.f32 %v735
    %vm757 = vweird.f32 %v751
    %vm758 = vmor %vm756, %vm757
    %v759 = vsel %vm758, %v751, %v755
    %v760 = vand.u32 2147483647, %v735
    %vm761 = vcmp.eq.f32.partialorder %v760, 8.507059e+37
    %v762 = vand.u32 %v735, 2147483648
    %v763 = vor.u32 1.1754944e-38, %v762
    %v764 = vsel %vm761, %v763, %v759
    %v765 = vmul.f32 1.0, %v764
    %v766 = vmul.f32 %v726, %v750
    %v767 = vmul.f32 %v727, %v765
    %v768 = vld [vmem:[%s12] sm:$0xff]
    %v769 = vld [vmem:[%s12 + $0x8] sm:$0xff]
    %v770 = vld [vmem:[%s12 + $0x10] sm:$0xff]
    %v771 = vld [vmem:[%s12 + $0x18] sm:$0xff]
    %v772 = vld [vmem:[%s13] sm:$0x1]
    %v774 = vperm.slane %v772, 0
    %v777 = vsel %vm54, %v766, 0
    %v780 = vsel %vm54, %v767, 0
    %782 = vmatpush.msra.mxu0 0.0
    %783 = vmatpush.msra.mxu0 0.0
    %784 = vmatpush.msra.mxu0 0.0
    %785 = vmatpush.msra.mxu0 0.0
    %786 = vmatpush.msra.mxu0 0.0
    %787 = vmatpush.msra.mxu0 0.0
    %788 = vmatpush.msra.mxu0 0.0
    %789 = vmatpush.msra.mxu0 0.0
    %790 = vmatpush.msra.mxu0 0.0
    %791 = vmatpush.msra.mxu0 0.0
    %792 = vmatpush.msra.mxu0 0.0
    %793 = vmatpush.msra.mxu0 0.0
    %794 = vmatpush.msra.mxu0 %v771
    %795 = vmatpush.msra.mxu0 %v770
    %796 = vmatpush.msra.mxu0 %v769
    %797 = vmatpush.msra.mxu0 %v768
    %798 = vmatmul.f32.gmra.mxu0 %v777
    %v799 = vpop.f32.mrf.mxu0
    %v800 = vadd.f32 %v774, %v799
    %801 = vmatmul.f32.gmra.mxu0 %v780
    %v802 = vpop.f32.mrf.mxu0
    %v803 = vadd.f32 %v774, %v802
    %804 = vdwg.mxu0
    %v805 = vadd.f32 %v48, %v800
    %v806 = vadd.f32 %v49, %v803
    %807 = vst.msk [vmem:[#allocation2] sm:$0xff] %vm54, %v805
    %808 = vst.msk [vmem:[#allocation2 + $0x8] sm:$0xff] %vm54, %v806
    // Predicated region
    $region58: #{temporal_self_attention.1} parent=1 // pred_check
      _
    $region59: #{temporal_self_attention.1} parent=1 // pred_check_branch
      %810 = sbr.rel (0) target = $region61
    $region60: #{temporal_self_attention.1} parent=1 // pred_region
      %812 = vsyncadd [#allocation3], 0
      %s813 = sshll.u32 [#allocation2], 4
      %s814 = int_to_ptr.vmem [resolvable:$true] %s813
      %s815 = sshll.u32 %s14, 4
      %s816 = int_to_ptr.hbm [resolvable:$true] %s815
      %821 = dma.vmem_to_hbm [thread:$0]  %s814, 256, %s816, [#allocation3], 128, 128, 8
    $region61: #{temporal_self_attention.1} parent=1 // pred_fallthru
      _
    // Predicated region
    $region62: #{temporal_self_attention.1} parent=1 // pred_check
      _
    $region63: #{temporal_self_attention.1} parent=1 // pred_check_branch
      %823 = sbr.rel (0) target = $region65
    $region64: #{temporal_self_attention.1} parent=1 // pred_region
      %825 = dma.done [#allocation3], 256
    $region65: #{temporal_self_attention.1} parent=1 // pred_fallthru
      _
    %826 = vsyncpa [#allocation3], 1

</llo_original>
